<compile_context>
chip_gen: v6e
topology: v6e:2x2x1
jax: 0.10.0
libtpu: 0.0.40
codegen_flags: <defaults>
</compile_context>

<pallas_src>
import jax
import jax.numpy as jnp
from jax.experimental import pallas as pl
from jax.experimental.pallas import tpu as pltpu


def _round_up(x, m):
    return ((x + m - 1) // m) * m


def _choose_tile(dim_pad, cap):
    # dim_pad is a multiple of 128; pick the largest power-of-two tile <= cap dividing it.
    t = cap
    while dim_pad % t != 0:
        t //= 2
    return t


# ---------------- encode: H = sigmoid(R @ V + mu) (MXU hot path) ----------------

def _encode_kernel(r_ref, v_ref, mu_ref, h_ref, acc_ref):
    k = pl.program_id(2)

    @pl.when(k == 0)
    def _():
        acc_ref[...] = jnp.zeros_like(acc_ref)

    acc_ref[...] += jnp.dot(r_ref[...], v_ref[...],
                            preferred_element_type=jnp.float32)

    @pl.when(k == pl.num_programs(2) - 1)
    def _():
        z = acc_ref[...] + mu_ref[...]                       # f32 acc + f32 bias
        sig = pl.reciprocal(1.0 + jnp.exp(-z), approx=True)  # EUP exp + EUP rcp
        h_ref[...] = sig.astype(h_ref.dtype)                 # bf16 H


def _encode(R_bf16, V_bf16, mu_f32, *, tm, tn, tk):
    ni_pad, nu_pad = R_bf16.shape
    _, d_pad = V_bf16.shape
    grid = (ni_pad // tm, d_pad // tn, nu_pad // tk)
    return pl.pallas_call(
        _encode_kernel,
        out_shape=jax.ShapeDtypeStruct((ni_pad, d_pad), jnp.bfloat16),
        grid_spec=pltpu.PrefetchScalarGridSpec(
            num_scalar_prefetch=0,
            grid=grid,
            in_specs=[
                pl.BlockSpec((tm, tk), lambda i, j, k: (i, k)),   # R tile
                pl.BlockSpec((tk, tn), lambda i, j, k: (k, j)),   # V tile
                pl.BlockSpec((1, tn), lambda i, j, k: (0, j)),    # mu slice
            ],
            out_specs=pl.BlockSpec((tm, tn), lambda i, j, k: (i, j)),
            scratch_shapes=[pltpu.VMEM((tm, tn), jnp.float32)],
        ),
        compiler_params=pltpu.CompilerParams(
            dimension_semantics=("parallel", "parallel", "arbitrary"),
            vmem_limit_bytes=48 * 1024 * 1024,   # < v7x 64 MiB physical, > default scoped
        ),
    )(R_bf16, V_bf16, mu_f32)


# ---------------- decode: out[k] = sum_d Hv[k,d] * Wj[k,d] + bj[k] ----------------

def _decode_kernel(hvt_ref, wjt_ref, bj_ref, out_ref):
    # hvt_ref/wjt_ref: (d_pad, TK) bf16; bj_ref/out_ref: (1, TK) f32
    prod = hvt_ref[...].astype(jnp.float32) * wjt_ref[...].astype(jnp.float32)
    out_ref[...] = jnp.sum(prod, axis=0, keepdims=True) + bj_ref[...]


def _decode(HvT, WjT, bj_row, *, tq):
    d_pad, K_pad = HvT.shape
    return pl.pallas_call(
        _decode_kernel,
        out_shape=jax.ShapeDtypeStruct((1, K_pad), jnp.float32),
        grid_spec=pltpu.PrefetchScalarGridSpec(
            num_scalar_prefetch=0,
            grid=(K_pad // tq,),
            in_specs=[
                pl.BlockSpec((d_pad, tq), lambda g: (0, g)),
                pl.BlockSpec((d_pad, tq), lambda g: (0, g)),
                pl.BlockSpec((1, tq), lambda g: (0, g)),
            ],
            out_specs=pl.BlockSpec((1, tq), lambda g: (0, g)),
        ),
        compiler_params=pltpu.CompilerParams(
            dimension_semantics=("parallel",),
        ),
    )(HvT, WjT, bj_row)


# ---------------- forward wrapper ----------------

def iautorec_forward(u, i, r, v, j, params, n_users, n_items):
    """IAutoRec.forward(u, i, r, v, j): (u, i, r) observed-rating COO triplets,
    (v, j) are the (item, user) query pairs to score."""
    V, mu, W, b = params["V"], params["mu"], params["W"], params["b"]
    d = V.shape[1]

    # Pad every dim to a multiple of 128 so all blocks are (8,128)-aligned and lane-dense.
    ni_pad = _round_up(n_items, 128)
    nu_pad = _round_up(n_users, 128)
    d_pad = _round_up(d, 128)

    tm = _choose_tile(ni_pad, 1024)
    if ni_pad // tm < 2:          # keep >= 2 parallel blocks so v7x's 2nd TC has work
        tm = max(ni_pad // 2, 8)
    tk = _choose_tile(nu_pad, 512)
    tn = _choose_tile(d_pad, 2048)   # tn = d_pad for typical d -> R streamed exactly once

    # --- glue: COO scatter -> dense padded ratings matrix, built directly in bf16 ---
    # NOTE: duplicate (i, u) ratings are summed in bf16 (fine when duplicates are rare).
    # TODO(synk): real AutoRec ratings are ~1% dense; replace the densify + dense matmul
    # with a scalar-prefetch segment-sum over sorted COO (or pl.when-skip all-zero tiles).
    R = jnp.zeros((ni_pad, nu_pad), jnp.bfloat16).at[i, u].add(r.astype(jnp.bfloat16))

    V_pad = jnp.zeros((nu_pad, d_pad), jnp.bfloat16).at[:n_users, :d].set(
        V.astype(jnp.bfloat16))
    mu_pad = jnp.zeros((1, d_pad), jnp.float32).at[:, :d].set(mu)

    H = _encode(R, V_pad, mu_pad, tm=tm, tn=tn, tk=tk)   # (ni_pad, d_pad) bf16

    # --- glue: bf16 gather + transpose of query rows (padded d-cols of W are zero, so
    #     the sigmoid(mu) padding of H contributes nothing to the reduction) ---
    # TODO(synk): fuse the H[v]/W[j] row gathers into the decode kernel via
    # PrefetchScalarGridSpec(num_scalar_prefetch=2) + manual row DMA to drop these passes.
    K = v.shape[0]
    K_pad = _round_up(K, 128)
    tq = _choose_tile(K_pad, 512)       # up to 512 queries per lane-dense block
    if K_pad // tq < 2 and tq >= 256:   # >= 2 parallel blocks for v7x when possible
        tq //= 2

    v_pad = jnp.zeros((K_pad,), v.dtype).at[:K].set(v)
    j_pad = jnp.zeros((K_pad,), j.dtype).at[:K].set(j)

    W_pad = jnp.zeros((nu_pad, d_pad), jnp.bfloat16).at[:n_users, :d].set(
        W.astype(jnp.bfloat16))
    b_pad = jnp.zeros((nu_pad,), jnp.float32).at[:n_users].set(b)

    HvT = H[v_pad].T                     # (d_pad, K_pad) bf16  hidden rows of queried items
    WjT = W_pad[j_pad].T                 # (d_pad, K_pad) bf16  decoder rows of queried users
    bj = b_pad[j_pad][None, :]           # (1, K_pad)  f32      user bias, lane-dense

    out = _decode(HvT, WjT, bj, tq=tq)   # (1, K_pad)
    return out[0, :K]


def iautorec_reference(u, i, r, v, j, params, n_users, n_items):
    R = jnp.zeros((n_items, n_users), jnp.float32).at[i, u].add(r)
    H = jax.nn.sigmoid(R @ params["V"] + params["mu"])
    return jnp.sum(H[v] * params["W"][j], axis=-1) + params["b"][j]


if __name__ == "__main__":
    key = jax.random.PRNGKey(0)
    n_users, n_items, d = 16, 32, 32   # small shapes (padded to 128 internally)
    nnz, K = 64, 16                    # observed ratings, query pairs

    k1, k2, k3, k4, k5, k6, k7 = jax.random.split(key, 7)

    # Deterministic parameter init, matching AutoRec.__init__(n_users, d, g, f):
    #   v = 0.001*randn(n, d), mu = zeros(1, d), w = 0.001*randn(n, d), b = zeros(n)
    params = {
        "V":  0.001 * jax.random.normal(k1, (n_users, d), jnp.float32),
        "mu": jnp.zeros((1, d), jnp.float32),
        "W":  0.001 * jax.random.normal(k2, (n_users, d), jnp.float32),
        "b":  jnp.zeros((n_users,), jnp.float32),
    }

    u = jax.random.randint(k3, (nnz,), 0, n_users)                    # rating user ids
    i = jax.random.randint(k4, (nnz,), 0, n_items)                    # rating item ids
    r = jax.random.uniform(k5, (nnz,), jnp.float32, 1.0, 5.0)         # rating values
    v = jax.random.randint(k6, (K,), 0, n_items)                      # query item ids
    j = jax.random.randint(k7, (K,), 0, n_users)                      # query user ids

    fwd = jax.jit(iautorec_forward, static_argnames=("n_users", "n_items"))
    out = fwd(u, i, r, v, j, params, n_users=n_users, n_items=n_items)
    out = jax.block_until_ready(out)

    ref = iautorec_reference(u, i, r, v, j, params, n_users, n_items)
    assert out.shape == (K,)
    # bf16 R/V/W/H (f32 accumulation + f32 epilogue) vs pure-f32 reference -> loosened tol.
    assert jnp.allclose(out, ref, atol=2e-4, rtol=5e-3), (out, ref)

    print("KERNEL_OK")
</pallas_src>

<mosaic_0001>
module attributes {stable_mosaic.version = 11 : i64} {
  func.func @_encode_kernel(%arg0: i32, %arg1: i32, %arg2: i32, %arg3: memref<64x128xbf16, #tpu.memory_space<vmem>>, %arg4: memref<128x128xbf16, #tpu.memory_space<vmem>>, %arg5: memref<1x128xf32, #tpu.memory_space<vmem>>, %arg6: memref<64x128xbf16, #tpu.memory_space<vmem>>, %arg7: memref<64x128xf32, #tpu.memory_space<vmem>>) attributes {dimension_semantics = [#tpu.dimension_semantics<parallel>, #tpu.dimension_semantics<parallel>, #tpu.dimension_semantics<arbitrary>], iteration_bounds = array<i64: 2, 1, 1>, scalar_prefetch = 0 : i64, scratch_operands = 1 : i64, tpu.core_type = #tpu.core_type<tc>, window_params = [{transform_indices = @transform_0, window_bounds = array<i64: 64, 128>}, {transform_indices = @transform_1, window_bounds = array<i64: 128, 128>}, {transform_indices = @transform_2, window_bounds = array<i64: 1, 128>}, {transform_indices = @transform_3, window_bounds = array<i64: 64, 128>}]} {
    %c0_i32 = arith.constant 0 : i32
    %0 = arith.cmpi eq, %arg2, %c0_i32 : i32
    %1 = arith.extui %0 : i1 to i32
    %c0_i32_0 = arith.constant 0 : i32
    %2 = arith.cmpi ne, %1, %c0_i32_0 : i32
    scf.if %2 {
      %cst_10 = arith.constant 0.000000e+00 : f32
      %12 = vector.broadcast %cst_10 : f32 to vector<64x128xf32>
      %c0_11 = arith.constant 0 : index
      %c0_12 = arith.constant 0 : index
      %13 = vector.load %arg7[%c0_11, %c0_12] : memref<64x128xf32, #tpu.memory_space<vmem>>, vector<64x128xf32>
      tpu.vector_store %arg7[%c0_11, %c0_12], %12 {strides = array<i32>} : memref<64x128xf32, #tpu.memory_space<vmem>>, vector<64x128xf32>,
    } else {
    }
    %c0 = arith.constant 0 : index
    %c0_1 = arith.constant 0 : index
    %3 = vector.load %arg7[%c0, %c0_1] : memref<64x128xf32, #tpu.memory_space<vmem>>, vector<64x128xf32>
    %c0_2 = arith.constant 0 : index
    %c0_3 = arith.constant 0 : index
    %4 = vector.load %arg3[%c0_2, %c0_3] : memref<64x128xbf16, #tpu.memory_space<vmem>>, vector<64x128xbf16>
    %c0_4 = arith.constant 0 : index
    %c0_5 = arith.constant 0 : index
    %5 = vector.load %arg4[%c0_4, %c0_5] : memref<128x128xbf16, #tpu.memory_space<vmem>>, vector<128x128xbf16>
    %cst = arith.constant dense<0.000000e+00> : vector<64x128xf32>
    %6 = tpu.matmul %4, %5, %cst {dimension_numbers = #tpu.dot_dimension_numbers<[1], [0], [0], [1], [0, 0, 1, 1], [], []>} : vector<64x128xbf16>, vector<128x128xbf16>, vector<64x128xf32> -> vector<64x128xf32>
    %7 = arith.addf %3, %6 : vector<64x128xf32>
    %c0_6 = arith.constant 0 : index
    %c0_7 = arith.constant 0 : index
    %8 = vector.load %arg7[%c0_6, %c0_7] : memref<64x128xf32, #tpu.memory_space<vmem>>, vector<64x128xf32>
    tpu.vector_store %arg7[%c0_6, %c0_7], %7 {strides = array<i32>} : memref<64x128xf32, #tpu.memory_space<vmem>>, vector<64x128xf32>,
    %c0_i32_8 = arith.constant 0 : i32
    %9 = arith.cmpi eq, %arg2, %c0_i32_8 : i32
    %10 = arith.extui %9 : i1 to i32
    %c0_i32_9 = arith.constant 0 : i32
    %11 = arith.cmpi ne, %10, %c0_i32_9 : i32
    scf.if %11 {
      %c0_10 = arith.constant 0 : index
      %c0_11 = arith.constant 0 : index
      %12 = vector.load %arg7[%c0_10, %c0_11] : memref<64x128xf32, #tpu.memory_space<vmem>>, vector<64x128xf32>
      %c0_12 = arith.constant 0 : index
      %c0_13 = arith.constant 0 : index
      %13 = vector.load %arg5[%c0_12, %c0_13] : memref<1x128xf32, #tpu.memory_space<vmem>>, vector<1x128xf32>
      %14 = vector.broadcast %13 : vector<1x128xf32> to vector<64x128xf32>
      %15 = arith.addf %12, %14 : vector<64x128xf32>
      %cst_14 = arith.constant 0.000000e+00 : f32
      %16 = vector.broadcast %cst_14 : f32 to vector<64x128xf32>
      %17 = arith.subf %16, %15 : vector<64x128xf32>
      %18 = math.exp %17 : vector<64x128xf32>
      %cst_15 = arith.constant 1.000000e+00 : f32
      %19 = vector.broadcast %cst_15 : f32 to vector<64x128xf32>
      %20 = arith.addf %19, %18 : vector<64x128xf32>
      %21 = tpu.reciprocal %20 {approx = true} : vector<64x128xf32> -> vector<64x128xf32>
      %22 = arith.truncf %21 : vector<64x128xf32> to vector<64x128xbf16>
      %c0_16 = arith.constant 0 : index
      %c0_17 = arith.constant 0 : index
      %23 = vector.load %arg6[%c0_16, %c0_17] : memref<64x128xbf16, #tpu.memory_space<vmem>>, vector<64x128xbf16>
      tpu.vector_store %arg6[%c0_16, %c0_17], %22 {strides = array<i32>} : memref<64x128xbf16, #tpu.memory_space<vmem>>, vector<64x128xbf16>,
    } else {
    }
    return
  }
  func.func @transform_0(%arg0: i32, %arg1: i32, %arg2: i32) -> (i32, i32) {
    %c0_i32 = arith.constant 0 : i32
    return %arg0, %arg2 : i32, i32
  }
  func.func @transform_1(%arg0: i32, %arg1: i32, %arg2: i32) -> (i32, i32) {
    %c0_i32 = arith.constant 0 : i32
    return %arg2, %arg1 : i32, i32
  }
  func.func @transform_2(%arg0: i32, %arg1: i32, %arg2: i32) -> (i32, i32) {
    %c0_i32 = arith.constant 0 : i32
    %c0_i32_0 = arith.constant 0 : i32
    return %c0_i32, %arg1 : i32, i32
  }
  func.func @transform_3(%arg0: i32, %arg1: i32, %arg2: i32) -> (i32, i32) {
    %c0_i32 = arith.constant 0 : i32
    return %arg0, %arg1 : i32, i32
  }
}

module attributes {stable_mosaic.version = 11 : i64} {
  func.func @_decode_kernel(%arg0: i32, %arg1: memref<128x128xbf16, #tpu.memory_space<vmem>>, %arg2: memref<128x128xbf16, #tpu.memory_space<vmem>>, %arg3: memref<1x128xf32, #tpu.memory_space<vmem>>, %arg4: memref<1x128xf32, #tpu.memory_space<vmem>>) attributes {dimension_semantics = [#tpu.dimension_semantics<parallel>], iteration_bounds = array<i64: 1>, scalar_prefetch = 0 : i64, scratch_operands = 0 : i64, tpu.core_type = #tpu.core_type<tc>, window_params = [{transform_indices = @transform_0, window_bounds = array<i64: 128, 128>}, {transform_indices = @transform_1, window_bounds = array<i64: 128, 128>}, {transform_indices = @transform_2, window_bounds = array<i64: 1, 128>}, {transform_indices = @transform_3, window_bounds = array<i64: 1, 128>}]} {
    %c0 = arith.constant 0 : index
    %c0_0 = arith.constant 0 : index
    %0 = vector.load %arg1[%c0, %c0_0] : memref<128x128xbf16, #tpu.memory_space<vmem>>, vector<128x128xbf16>
    %1 = arith.extf %0 : vector<128x128xbf16> to vector<128x128xf32>
    %c0_1 = arith.constant 0 : index
    %c0_2 = arith.constant 0 : index
    %2 = vector.load %arg2[%c0_1, %c0_2] : memref<128x128xbf16, #tpu.memory_space<vmem>>, vector<128x128xbf16>
    %3 = arith.extf %2 : vector<128x128xbf16> to vector<128x128xf32>
    %4 = arith.mulf %1, %3 : vector<128x128xf32>
    %cst = arith.constant dense<0.000000e+00> : vector<128xf32>
    %5 = vector.multi_reduction <add>, %4, %cst [0] : vector<128x128xf32> to vector<128xf32>
    %6 = vector.shape_cast %5 : vector<128xf32> to vector<1x128xf32>
    %c0_3 = arith.constant 0 : index
    %c0_4 = arith.constant 0 : index
    %7 = vector.load %arg3[%c0_3, %c0_4] : memref<1x128xf32, #tpu.memory_space<vmem>>, vector<1x128xf32>
    %8 = arith.addf %6, %7 : vector<1x128xf32>
    %c0_5 = arith.constant 0 : index
    %c0_6 = arith.constant 0 : index
    %9 = vector.load %arg4[%c0_5, %c0_6] : memref<1x128xf32, #tpu.memory_space<vmem>>, vector<1x128xf32>
    tpu.vector_store %arg4[%c0_5, %c0_6], %8 {strides = array<i32>} : memref<1x128xf32, #tpu.memory_space<vmem>>, vector<1x128xf32>,
    return
  }
  func.func @transform_0(%arg0: i32) -> (i32, i32) {
    %c0_i32 = arith.constant 0 : i32
    %c0_i32_0 = arith.constant 0 : i32
    return %c0_i32, %arg0 : i32, i32
  }
  func.func @transform_1(%arg0: i32) -> (i32, i32) {
    %c0_i32 = arith.constant 0 : i32
    %c0_i32_0 = arith.constant 0 : i32
    return %c0_i32, %arg0 : i32, i32
  }
  func.func @transform_2(%arg0: i32) -> (i32, i32) {
    %c0_i32 = arith.constant 0 : i32
    %c0_i32_0 = arith.constant 0 : i32
    return %c0_i32, %arg0 : i32, i32
  }
  func.func @transform_3(%arg0: i32) -> (i32, i32) {
    %c0_i32 = arith.constant 0 : i32
    %c0_i32_0 = arith.constant 0 : i32
    return %c0_i32, %arg0 : i32, i32
  }
}

</mosaic_0001>

<llo_original>
// kernel: iautorec_forward.2
$region0: #{iautorec_forward.2}
  #allocation0 [shape = 'u32[]', space=smem, size = 0x4, offset = 0x4, fixed_abs, tag = 'smem constant byte address 0x4 - core index']
  #allocation1 [shape = 'u32[144,128]{1,0:T(1,128)}', space=vmem, size = 0x12000, scoped, tag = 'internal scratch']
  #allocation2 [shape = 'f32[64,128]{1,0:T(8,128)}', space=vmem, size = 0x8000, scoped, tag = 'scratch operand']
  %s0 = inlined_call_operand.vmem [shape: bf16[128,128], index: 0, kind: input, shape index: {}]
  %s1 = inlined_call_operand.vmem [shape: bf16[128,128], index: 1, kind: input, shape index: {}]
  %s2 = inlined_call_operand.vmem [shape: f32[1,128], index: 2, kind: input, shape index: {}]
  %s3 = inlined_call_operand.vmem [shape: bf16[128,128], index: 3, kind: output, shape index: {}]
  %s4 = sld [smem:[#allocation0]]
  $region53: #{iautorec_forward.2} parent=0
    _
  %s6 = ssub.s32 1, %s4
  %s7 = scalar_select 0, %s6, %s4
  loop: start=0, step=1, limit=4
  $region2: #{iautorec_forward.2} parent=0 // loop_pre_header
    _
  $region3: #{iautorec_forward.2} parent=0 // loop_header
    %s9 = sphi 0, %s13
    %p10 = scmp.ge.s32.totalorder %s9, 4
    %s16 = sphi 0, %s35
    %s17 = sphi 0, %s31
    %s18 = sphi 0, %s27
    %s19 = sphi 0, %s16
    %s20 = sphi 0, %s17
    %s21 = sphi 0, %s18
    %s22 = sphi 0, %s19
    %s23 = sphi 0, %s20
    %s24 = sphi 0, %s21
    %s40 = sphi 0, %s42
    %s43 = sphi 0, %s40
    %s44 = sphi 0, %s43
    %s60 = sphi 0, %s44
    %s68 = sphi 0, %s70
    %s71 = sphi 0, %s68
    %s72 = sphi 0, %s71
    %s88 = sphi 0, %s72
    %s94 = sphi 0, %s96
    %s97 = sphi 0, %s94
    %s98 = sphi 0, %s97
    %s114 = sphi 0, %s98
    %s122 = sphi 0, %s124
    %s125 = sphi 0, %s122
    %s126 = sphi 0, %s125
    %s142 = sphi 0, %s126
  $region4: #{iautorec_forward.2} parent=0 // loop_header_branch
    %12 = sbr.rel (%p10) target = $region8
  $region5: #{iautorec_forward.2} parent=0 // loop_body
    %s14 = ssub.s32 %s9, 1
    %s15 = ssub.s32 %s9, 2
    %s25 = sadd.s32 1, %s18
    %p26 = scmp.ge.s32.totalorder %s25, 1
    %s27 = scalar_select %p26, 0, %s25
    %s28 = sadd.s32 1, %s17
    %s29 = scalar_select %p26, %s28, %s17
    %p30 = scmp.ge.s32.totalorder %s29, 1
    %s31 = scalar_select %p30, 0, %s29
    %s32 = sadd.s32 1, %s16
    %s33 = scalar_select %p30, %s32, %s16
    %p34 = scmp.ge.s32.totalorder %s33, 2
    %s35 = scalar_select %p34, 0, %s33
    %s36 = ssub.s32 %s16, %s35
    %s37 = ssub.s32 %s18, %s27
    %s38 = sor.u32 %s36, %s37
    %p39 = scmp.eq.s32.totalorder %s38, 0
    %s41 = sadd.s32 %s40, 1
    %s42 = scalar_select %p39, %s40, %s41
    %p45 = pneg %p39
    %p46 = scmp.eq.s32.totalorder %s9, 1
    %p47 = por %p45, %p46
    %p48 = scmp.ne.s32.totalorder %s40, %s43
    %p49 = scmp.eq.s32.totalorder %s9, 0
    %p50 = por %p48, %p49
    %p51 = scmp.ne.s32.totalorder %s40, %s43
    %p52 = scmp.eq.s32.totalorder %s14, 1
    %p53 = por %p51, %p52
    %p54 = scmp.ne.s32.totalorder %s43, %s44
    %p55 = scmp.eq.s32.totalorder %s14, 0
    %p56 = por %p54, %p55
    %p57 = scmp.ne.s32.totalorder %s43, %s44
    %p58 = scmp.eq.s32.totalorder %s15, 1
    %p59 = por %p57, %p58
    %p61 = scmp.ne.s32.totalorder %s44, %s60
    %p62 = scmp.eq.s32.totalorder %s15, 0
    %p63 = por %p61, %p62
    %s64 = ssub.s32 %s18, %s27
    %s65 = ssub.s32 %s17, %s31
    %s66 = sor.u32 %s64, %s65
    %p67 = scmp.eq.s32.totalorder %s66, 0
    %s69 = sadd.s32 %s68, 1
    %s70 = scalar_select %p67, %s68, %s69
    %p73 = pneg %p67
    %p74 = scmp.eq.s32.totalorder %s9, 1
    %p75 = por %p73, %p74
    %p76 = scmp.ne.s32.totalorder %s68, %s71
    %p77 = scmp.eq.s32.totalorder %s9, 0
    %p78 = por %p76, %p77
    %p79 = scmp.ne.s32.totalorder %s68, %s71
    %p80 = scmp.eq.s32.totalorder %s14, 1
    %p81 = por %p79, %p80
    %p82 = scmp.ne.s32.totalorder %s71, %s72
    %p83 = scmp.eq.s32.totalorder %s14, 0
    %p84 = por %p82, %p83
    %p85 = scmp.ne.s32.totalorder %s71, %s72
    %p86 = scmp.eq.s32.totalorder %s15, 1
    %p87 = por %p85, %p86
    %p89 = scmp.ne.s32.totalorder %s72, %s88
    %p90 = scmp.eq.s32.totalorder %s15, 0
    %p91 = por %p89, %p90
    %s92 = ssub.s32 %s17, %s31
    %p93 = scmp.eq.s32.totalorder %s92, 0
    %s95 = sadd.s32 %s94, 1
    %s96 = scalar_select %p93, %s94, %s95
    %p99 = pneg %p93
    %p100 = scmp.eq.s32.totalorder %s9, 1
    %p101 = por %p99, %p100
    %p102 = scmp.ne.s32.totalorder %s94, %s97
    %p103 = scmp.eq.s32.totalorder %s9, 0
    %p104 = por %p102, %p103
    %p105 = scmp.ne.s32.totalorder %s94, %s97
    %p106 = scmp.eq.s32.totalorder %s14, 1
    %p107 = por %p105, %p106
    %p108 = scmp.ne.s32.totalorder %s97, %s98
    %p109 = scmp.eq.s32.totalorder %s14, 0
    %p110 = por %p108, %p109
    %p111 = scmp.ne.s32.totalorder %s97, %s98
    %p112 = scmp.eq.s32.totalorder %s15, 1
    %p113 = por %p111, %p112
    %p115 = scmp.ne.s32.totalorder %s98, %s114
    %p116 = scmp.eq.s32.totalorder %s15, 0
    %p117 = por %p115, %p116
    %s118 = ssub.s32 %s16, %s35
    %s119 = ssub.s32 %s17, %s31
    %s120 = sor.u32 %s118, %s119
    %p121 = scmp.eq.s32.totalorder %s120, 0
    %s123 = sadd.s32 %s122, 1
    %s124 = scalar_select %p121, %s122, %s123
    %p127 = pneg %p121
    %p128 = scmp.eq.s32.totalorder %s9, 1
    %p129 = por %p127, %p128
    %p130 = scmp.ne.s32.totalorder %s122, %s125
    %p131 = scmp.eq.s32.totalorder %s9, 0
    %p132 = por %p130, %p131
    %p133 = scmp.ne.s32.totalorder %s122, %s125
    %p134 = scmp.eq.s32.totalorder %s14, 1
    %p135 = por %p133, %p134
    %p136 = scmp.ne.s32.totalorder %s125, %s126
    %p137 = scmp.eq.s32.totalorder %s14, 0
    %p138 = por %p136, %p137
    %p139 = scmp.ne.s32.totalorder %s125, %s126
    %p140 = scmp.eq.s32.totalorder %s15, 1
    %p141 = por %p139, %p140
    %p143 = scmp.ne.s32.totalorder %s126, %s142
    %p144 = scmp.eq.s32.totalorder %s15, 0
    %p145 = por %p143, %p144
    %p146 = scmp.le.s32.totalorder 1, %s9
    %p147 = scmp.lt.s32.totalorder %s9, 3
    %p148 = pnand %p146, %p147
    %p149 = pneg %p148
    // Predicated region
    $region9: #{iautorec_forward.2} parent=5 // pred_check
      _
    $region10: #{iautorec_forward.2} parent=5 // pred_check_branch
      %151 = sbr.rel (%p148) target = $region12
    $region11: #{iautorec_forward.2} parent=5 // pred_region
      %s152 = ssub.s32 %s9, 1
      // Predicated region
      $region13: #{iautorec_forward.2} parent=11 // pred_check
        %p153 = pneg %p84
      $region14: #{iautorec_forward.2} parent=11 // pred_check_branch
        %155 = sbr.rel (%p153) target = $region16
      $region15: #{iautorec_forward.2} parent=11 // pred_region
        %s156 = smul.u32 16, %s21
        %p157 = scmp.lt.s32.totalorder %s156, 15
        %s158 = scalar_select %p157, %s156, 15
        %p159 = scmp.lt.s32.totalorder %s20, 0
        %s160 = scalar_select %p159, %s20, 0
        %s161 = sadd.s32 %s160, %s158
        %s162 = smul.addr %s161, 4
        %s163 = scalar_lea.vmem %s1, %s162
        %s164 = smul.u32 16, %s21
      $region16: #{iautorec_forward.2} parent=11 // pred_fallthru
        _
      // Predicated region
      $region17: #{iautorec_forward.2} parent=11 // pred_check
        %p165 = pneg %p110
      $region18: #{iautorec_forward.2} parent=11 // pred_check_branch
        %167 = sbr.rel (%p165) target = $region20
      $region19: #{iautorec_forward.2} parent=11 // pred_region
        %p168 = scmp.lt.s32.totalorder %s20, 0
        %s169 = scalar_select %p168, %s20, 0
        %s170 = scalar_lea.vmem %s2, %s169
      $region20: #{iautorec_forward.2} parent=11 // pred_fallthru
        _
    $region12: #{iautorec_forward.2} parent=5 // pred_fallthru
      _
    %p171 = scmp.lt.s32.totalorder %s9, 2
    // Predicated region
    $region21: #{iautorec_forward.2} parent=5 // pred_check
      %p172 = pneg %p171
    $region22: #{iautorec_forward.2} parent=5 // pred_check_branch
      %174 = sbr.rel (%p172) target = $region24
    $region23: #{iautorec_forward.2} parent=5 // pred_region
      // Predicated region
      $region25: #{iautorec_forward.2} parent=23 // pred_check
        %p175 = pneg %p50
      $region26: #{iautorec_forward.2} parent=23 // pred_check_branch
        %177 = sbr.rel (%p175) target = $region28
      $region27: #{iautorec_forward.2} parent=23 // pred_region
        %s178 = smul.u32 8, %s16
        %p179 = scmp.lt.s32.totalorder %s178, 15
        %s180 = scalar_select %p179, %s178, 15
        %p181 = scmp.lt.s32.totalorder %s18, 0
        %s182 = scalar_select %p181, %s18, 0
        %s183 = sadd.s32 %s182, %s180
        %s184 = smul.addr %s183, 4
        %s185 = scalar_lea.vmem %s0, %s184
        %s186 = smul.u32 8, %s16
      $region28: #{iautorec_forward.2} parent=23 // pred_fallthru
        _
    $region24: #{iautorec_forward.2} parent=5 // pred_fallthru
      _
    %p187 = scmp.le.s32.totalorder 1, %s9
    %p188 = scmp.lt.s32.totalorder %s9, 3
    %p189 = pnand %p187, %p188
    %p190 = pneg %p189
    // Predicated region
    $region29: #{iautorec_forward.2} parent=5 // pred_check
      _
    $region30: #{iautorec_forward.2} parent=5 // pred_check_branch
      %192 = sbr.rel (%p189) target = $region32
    $region31: #{iautorec_forward.2} parent=5 // pred_region
      %s193 = ssub.s32 %s9, 1
      %s194 = smul.u32 8, %s19
      %p195 = scmp.lt.s32.totalorder %s194, 15
      %s196 = scalar_select %p195, %s194, 15
      %p197 = scmp.lt.s32.totalorder %s21, 0
      %s198 = scalar_select %p197, %s21, 0
      %s199 = sadd.s32 %s198, %s196
      %s200 = smul.addr %s199, 4
      %s201 = scalar_lea.vmem %s0, %s200
      %p202 = pneg %p56
      %p203 = pneg %p53
      %s204 = smul.u32 16, %s21
      %p205 = scmp.lt.s32.totalorder %s204, 15
      %s206 = scalar_select %p205, %s204, 15
      %p207 = scmp.lt.s32.totalorder %s20, 0
      %s208 = scalar_select %p207, %s20, 0
      %s209 = sadd.s32 %s208, %s206
      %s210 = smul.addr %s209, 4
      %s211 = scalar_lea.vmem %s1, %s210
      %p212 = pneg %p84
      %p213 = pneg %p81
      %p214 = scmp.lt.s32.totalorder %s20, 0
      %s215 = scalar_select %p214, %s20, 0
      %s216 = scalar_lea.vmem %s2, %s215
      %p217 = pneg %p110
      %p218 = pneg %p107
      %p219 = pneg %p138
      %p220 = pneg %p135
      %s221 = smul.u32 8, %s19
      %p222 = scmp.lt.s32.totalorder %s221, 15
      %s223 = scalar_select %p222, %s221, 15
      %p224 = scmp.lt.s32.totalorder %s20, 0
      %s225 = scalar_select %p224, %s20, 0
      %s226 = sadd.s32 %s225, %s223
      %s227 = smul.addr %s226, 4
      %s228 = scalar_lea.vmem %s3, %s227
      %s229 = smul.u32 8, %s19
      %p230 = scmp.lt.s32.totalorder %s229, 15
      %s231 = scalar_select %p230, %s229, 15
      %p232 = scmp.lt.s32.totalorder %s21, 0
      %s233 = scalar_select %p232, %s21, 0
      %s234 = sadd.s32 %s233, %s231
      %s235 = smul.addr %s234, 4
      %s236 = scalar_lea.vmem %s0, %s235
      %s237 = smul.u32 8, %s19
      %s238 = smul.u32 16, %s21
      %p239 = scmp.lt.s32.totalorder %s238, 15
      %s240 = scalar_select %p239, %s238, 15
      %p241 = scmp.lt.s32.totalorder %s20, 0
      %s242 = scalar_select %p241, %s20, 0
      %s243 = sadd.s32 %s242, %s240
      %s244 = smul.addr %s243, 4
      %s245 = scalar_lea.vmem %s1, %s244
      %s246 = smul.u32 16, %s21
      %p247 = scmp.lt.s32.totalorder %s20, 0
      %s248 = scalar_select %p247, %s20, 0
      %s249 = scalar_lea.vmem %s2, %s248
      %s250 = smul.u32 8, %s19
      %p251 = scmp.lt.s32.totalorder %s250, 15
      %s252 = scalar_select %p251, %s250, 15
      %p253 = scmp.lt.s32.totalorder %s20, 0
      %s254 = scalar_select %p253, %s20, 0
      %s255 = sadd.s32 %s254, %s252
      %s256 = smul.addr %s255, 4
      %s257 = scalar_lea.vmem %s3, %s256
      %s258 = smul.u32 8, %s19
      %p260 = scmp.eq.s32.totalorder %s21, 0
      // Predicated region
      $region33: #{iautorec_forward.2} parent=31 // pred_check
        %p261 = pneg %p260
      $region34: #{iautorec_forward.2} parent=31 // pred_check_branch
        %263 = sbr.rel (%p261) target = $region36
      $region35: #{iautorec_forward.2} parent=31 // pred_region
        %264 = vst [vmem:[#allocation2] sm:$0xff] 0.0
        %265 = vst [vmem:[#allocation2 + $0x8] sm:$0xff] 0.0
        %266 = vst [vmem:[#allocation2 + $0x10] sm:$0xff] 0.0
        %267 = vst [vmem:[#allocation2 + $0x18] sm:$0xff] 0.0
        %268 = vst [vmem:[#allocation2 + $0x20] sm:$0xff] 0.0
        %269 = vst [vmem:[#allocation2 + $0x28] sm:$0xff] 0.0
        %270 = vst [vmem:[#allocation2 + $0x30] sm:$0xff] 0.0
        %271 = vst [vmem:[#allocation2 + $0x38] sm:$0xff] 0.0
      $region36: #{iautorec_forward.2} parent=31 // pred_fallthru
        _
      %v272 = vld [vmem:[#allocation2] sm:$0xff]
      %v273 = vld [vmem:[#allocation2 + $0x8] sm:$0xff]
      %v274 = vld [vmem:[#allocation2 + $0x10] sm:$0xff]
      %v275 = vld [vmem:[#allocation2 + $0x18] sm:$0xff]
      %v276 = vld [vmem:[#allocation2 + $0x20] sm:$0xff]
      %v277 = vld [vmem:[#allocation2 + $0x28] sm:$0xff]
      %v278 = vld [vmem:[#allocation2 + $0x30] sm:$0xff]
      %v279 = vld [vmem:[#allocation2 + $0x38] sm:$0xff]
      %v280 = vld [vmem:[%s236] sm:$0xf]
      %v281 = vld [vmem:[%s236 + $0x4] sm:$0xf]
      %v282 = vld [vmem:[%s236 + $0x8] sm:$0xf]
      %v283 = vld [vmem:[%s236 + $0xc] sm:$0xf]
      %v284 = vld [vmem:[%s236 + $0x10] sm:$0xf]
      %v285 = vld [vmem:[%s236 + $0x14] sm:$0xf]
      %v286 = vld [vmem:[%s236 + $0x18] sm:$0xf]
      %v287 = vld [vmem:[%s236 + $0x1c] sm:$0xf]
      %v288 = vld [vmem:[%s245] sm:$0xf]
      %v289 = vld [vmem:[%s245 + $0x4] sm:$0xf]
      %v290 = vld [vmem:[%s245 + $0x8] sm:$0xf]
      %v291 = vld [vmem:[%s245 + $0xc] sm:$0xf]
      %v292 = vld [vmem:[%s245 + $0x10] sm:$0xf]
      %v293 = vld [vmem:[%s245 + $0x14] sm:$0xf]
      %v294 = vld [vmem:[%s245 + $0x18] sm:$0xf]
      %v295 = vld [vmem:[%s245 + $0x1c] sm:$0xf]
      %v296 = vld [vmem:[%s245 + $0x20] sm:$0xf]
      %v297 = vld [vmem:[%s245 + $0x24] sm:$0xf]
      %v298 = vld [vmem:[%s245 + $0x28] sm:$0xf]
      %v299 = vld [vmem:[%s245 + $0x2c] sm:$0xf]
      %v300 = vld [vmem:[%s245 + $0x30] sm:$0xf]
      %v301 = vld [vmem:[%s245 + $0x34] sm:$0xf]
      %v302 = vld [vmem:[%s245 + $0x38] sm:$0xf]
      %v303 = vld [vmem:[%s245 + $0x3c] sm:$0xf]
      %v312 = vunpack.c.l.b16 %v280
      %v313 = vunpack.c.l.b16 %v281
      %v314 = vunpack.c.l.b16 %v282
      %v315 = vunpack.c.l.b16 %v283
      %v316 = vunpack.c.l.b16 %v284
      %v317 = vunpack.c.l.b16 %v285
      %v318 = vunpack.c.l.b16 %v286
      %v319 = vunpack.c.l.b16 %v287
      %v320 = vpack.c.b16 %v313, %v312
      %v321 = vpack.c.b16 %v315, %v314
      %v322 = vpack.c.b16 %v317, %v316
      %v323 = vpack.c.b16 %v319, %v318
      %v344 = vunpack.c.l.b16 %v288
      %v345 = vunpack.c.l.b16 %v289
      %v346 = vunpack.c.l.b16 %v290
      %v347 = vunpack.c.l.b16 %v291
      %v348 = vunpack.c.l.b16 %v292
      %v349 = vunpack.c.l.b16 %v293
      %v350 = vunpack.c.l.b16 %v294
      %v351 = vunpack.c.l.b16 %v295
      %v352 = vunpack.c.l.b16 %v296
      %v353 = vunpack.c.l.b16 %v297
      %v354 = vunpack.c.l.b16 %v298
      %v355 = vunpack.c.l.b16 %v299
      %v356 = vunpack.c.l.b16 %v300
      %v357 = vunpack.c.l.b16 %v301
      %v358 = vunpack.c.l.b16 %v302
      %v359 = vunpack.c.l.b16 %v303
      %v360 = vpack.c.b16 %v345, %v344
      %v361 = vpack.c.b16 %v347, %v346
      %v362 = vpack.c.b16 %v349, %v348
      %v363 = vpack.c.b16 %v351, %v350
      %v364 = vpack.c.b16 %v353, %v352
      %v365 = vpack.c.b16 %v355, %v354
      %v366 = vpack.c.b16 %v357, %v356
      %v367 = vpack.c.b16 %v359, %v358
      %376 = vmatprep.subr.bf16.mxu0 0
      %377 = vmatpush1.bf16.msra.mxu0 %v367
      %378 = vmatprep.subr.bf16.mxu0 0
      %379 = vmatpush1.bf16.msra.mxu0 %v366
      %380 = vmatprep.subr.bf16.mxu0 0
      %381 = vmatpush1.bf16.msra.mxu0 %v365
      %382 = vmatprep.subr.bf16.mxu0 0
      %383 = vmatpush1.bf16.msra.mxu0 %v364
      %384 = vmatprep.subr.bf16.mxu0 0
      %385 = vmatpush1.bf16.msra.mxu0 %v363
      %386 = vmatprep.subr.bf16.mxu0 0
      %387 = vmatpush1.bf16.msra.mxu0 %v362
      %388 = vmatprep.subr.bf16.mxu0 0
      %389 = vmatpush1.bf16.msra.mxu0 %v361
      %390 = vmatprep.subr.bf16.mxu0 0
      %391 = vmatpush1.bf16.msra.mxu0 %v360
      %392 = vmatprep.subr.bf16.mxu0 0
      %393 = vmatpush2.bf16.msra.mxu0 0
      %394 = vmatprep.subr.bf16.mxu0 0
      %395 = vmatpush2.bf16.msra.mxu0 0
      %396 = vmatprep.subr.bf16.mxu0 0
      %397 = vmatpush2.bf16.msra.mxu0 0
      %398 = vmatprep.subr.bf16.mxu0 0
      %399 = vmatpush2.bf16.msra.mxu0 0
      %400 = vmatprep.subr.bf16.mxu0 0
      %401 = vmatpush2.bf16.msra.mxu0 0
      %402 = vmatprep.subr.bf16.mxu0 0
      %403 = vmatpush2.bf16.msra.mxu0 0
      %404 = vmatprep.subr.bf16.mxu0 0
      %405 = vmatpush2.bf16.msra.mxu0 0
      %406 = vmatprep.subr.bf16.mxu0 0
      %407 = vmatpush2.bf16.msra.mxu0 0
      %408 = vmatprep.mubr.bf16.mxu0 0
      %409 = vmatmul.mubr.bf16.gmra.mxu0 %v320
      %v410 = vpop.f32.mrf.mxu0
      %v411 = vadd.f32 0.0, %v410
      %v412 = vpop.f32.mrf.mxu0
      %v413 = vpop.f32.mrf.mxu0
      %v414 = vadd.f32 0.0, %v413
      %v415 = vpop.f32.mrf.mxu0
      %416 = vmatprep.mubr.bf16.mxu0 0
      %417 = vmatmul.mubr.bf16.gmra.mxu0 %v321
      %v418 = vpop.f32.mrf.mxu0
      %v419 = vadd.f32 0.0, %v418
      %v420 = vpop.f32.mrf.mxu0
      %v421 = vpop.f32.mrf.mxu0
      %v422 = vadd.f32 0.0, %v421
      %v423 = vpop.f32.mrf.mxu0
      %424 = vmatprep.mubr.bf16.mxu0 0
      %425 = vmatmul.mubr.bf16.gmra.mxu0 %v322
      %v426 = vpop.f32.mrf.mxu0
      %v427 = vadd.f32 0.0, %v426
      %v428 = vpop.f32.mrf.mxu0
      %v429 = vpop.f32.mrf.mxu0
      %v430 = vadd.f32 0.0, %v429
      %v431 = vpop.f32.mrf.mxu0
      %432 = vmatprep.mubr.bf16.mxu0 0
      %433 = vmatmul.mubr.bf16.gmra.mxu0 %v323
      %v434 = vpop.f32.mrf.mxu0
      %v435 = vadd.f32 0.0, %v434
      %v436 = vpop.f32.mrf.mxu0
      %v437 = vpop.f32.mrf.mxu0
      %v438 = vadd.f32 0.0, %v437
      %v439 = vpop.f32.mrf.mxu0
      %440 = vdwg.mxu0
      %v441 = vadd.f32 %v272, %v411
      %v442 = vadd.f32 %v273, %v414
      %v443 = vadd.f32 %v274, %v419
      %v444 = vadd.f32 %v275, %v422
      %v445 = vadd.f32 %v276, %v427
      %v446 = vadd.f32 %v277, %v430
      %v447 = vadd.f32 %v278, %v435
      %v448 = vadd.f32 %v279, %v438
      %449 = vst [vmem:[#allocation2] sm:$0xff] %v441
      %450 = vst [vmem:[#allocation2 + $0x8] sm:$0xff] %v442
      %451 = vst [vmem:[#allocation2 + $0x10] sm:$0xff] %v443
      %452 = vst [vmem:[#allocation2 + $0x18] sm:$0xff] %v444
      %453 = vst [vmem:[#allocation2 + $0x20] sm:$0xff] %v445
      %454 = vst [vmem:[#allocation2 + $0x28] sm:$0xff] %v446
      %455 = vst [vmem:[#allocation2 + $0x30] sm:$0xff] %v447
      %456 = vst [vmem:[#allocation2 + $0x38] sm:$0xff] %v448
      // Predicated region
      $region37: #{iautorec_forward.2} parent=31 // pred_check
        %p457 = pneg %p260
      $region38: #{iautorec_forward.2} parent=31 // pred_check_branch
        %459 = sbr.rel (%p457) target = $region40
      $region39: #{iautorec_forward.2} parent=31 // pred_region
        %v460 = vld [vmem:[#allocation2] sm:$0xff]
        %v461 = vld [vmem:[#allocation2 + $0x8] sm:$0xff]
        %v462 = vld [vmem:[#allocation2 + $0x10] sm:$0xff]
        %v463 = vld [vmem:[#allocation2 + $0x18] sm:$0xff]
        %v464 = vld [vmem:[#allocation2 + $0x20] sm:$0xff]
        %v465 = vld [vmem:[#allocation2 + $0x28] sm:$0xff]
        %v466 = vld [vmem:[#allocation2 + $0x30] sm:$0xff]
        %v467 = vld [vmem:[#allocation2 + $0x38] sm:$0xff]
        %v468 = vld [vmem:[%s249] sm:$0x1]
        %v470 = vlaneseq
        %v471 = vshrl.u32 %v470, 7
        %v472 = vsub.s32 0, %v471
        %v473 = vrot.slane %v468, %v472
        %v475 = vadd.f32 %v460, %v473
        %v476 = vadd.f32 %v461, %v473
        %v477 = vadd.f32 %v462, %v473
        %v478 = vadd.f32 %v463, %v473
        %v479 = vadd.f32 %v464, %v473
        %v480 = vadd.f32 %v465, %v473
        %v481 = vadd.f32 %v466, %v473
        %v482 = vadd.f32 %v467, %v473
        %v483 = vsub.f32 0.0, %v475
        %v484 = vsub.f32 0.0, %v476
        %v485 = vsub.f32 0.0, %v477
        %v486 = vsub.f32 0.0, %v478
        %v487 = vsub.f32 0.0, %v479
        %v488 = vsub.f32 0.0, %v480
        %v489 = vsub.f32 0.0, %v481
        %v490 = vsub.f32 0.0, %v482
        %v491 = vmul.f32 %v483, 1.442695
        %v492 = vpow.pop %v491
        %v493 = vmul.f32 %v484, 1.442695
        %v494 = vpow.pop %v493
        %v495 = vmul.f32 %v485, 1.442695
        %v496 = vpow.pop %v495
        %v497 = vmul.f32 %v486, 1.442695
        %v498 = vpow.pop %v497
        %v499 = vmul.f32 %v487, 1.442695
        %v500 = vpow.pop %v499
        %v501 = vmul.f32 %v488, 1.442695
        %v502 = vpow.pop %v501
        %v503 = vmul.f32 %v489, 1.442695
        %v504 = vpow.pop %v503
        %v505 = vmul.f32 %v490, 1.442695
        %v506 = vpow.pop %v505
        %v507 = vadd.f32 %v492, 1.0
        %v508 = vadd.f32 %v494, 1.0
        %v509 = vadd.f32 %v496, 1.0
        %v510 = vadd.f32 %v498, 1.0
        %v511 = vadd.f32 %v500, 1.0
        %v512 = vadd.f32 %v502, 1.0
        %v513 = vadd.f32 %v504, 1.0
        %v514 = vadd.f32 %v506, 1.0
        %v515 = vrcp.pop %v507
        %v516 = vrcp.pop %v508
        %v517 = vrcp.pop %v509
        %v518 = vrcp.pop %v510
        %v519 = vrcp.pop %v511
        %v520 = vrcp.pop %v512
        %v521 = vrcp.pop %v513
        %v522 = vrcp.pop %v514
        %v523 = vpack.c.bf16 %v516, %v515
        %v524 = vpack.c.bf16 %v518, %v517
        %v525 = vpack.c.bf16 %v520, %v519
        %v526 = vpack.c.bf16 %v522, %v521
        %v531 = vunpack.c.l.b16 %v523
        %v532 = vunpack.c.h.b16 %v523
        %v533 = vunpack.c.l.b16 %v524
        %v534 = vunpack.c.h.b16 %v524
        %v535 = vunpack.c.l.b16 %v525
        %v536 = vunpack.c.h.b16 %v525
        %v537 = vunpack.c.l.b16 %v526
        %v538 = vunpack.c.h.b16 %v526
        %v539 = vpack.c.b16 %v531, %v531
        %v540 = vpack.c.b16 %v532, %v532
        %v541 = vpack.c.b16 %v533, %v533
        %v542 = vpack.c.b16 %v534, %v534
        %v543 = vpack.c.b16 %v535, %v535
        %v544 = vpack.c.b16 %v536, %v536
        %v545 = vpack.c.b16 %v537, %v537
        %v546 = vpack.c.b16 %v538, %v538
        %555 = vst [vmem:[%s257] sm:$0xf] %v539
        %556 = vst [vmem:[%s257 + $0x4] sm:$0xf] %v540
        %557 = vst [vmem:[%s257 + $0x8] sm:$0xf] %v541
        %558 = vst [vmem:[%s257 + $0xc] sm:$0xf] %v542
        %559 = vst [vmem:[%s257 + $0x10] sm:$0xf] %v543
        %560 = vst [vmem:[%s257 + $0x14] sm:$0xf] %v544
        %561 = vst [vmem:[%s257 + $0x18] sm:$0xf] %v545
        %562 = vst [vmem:[%s257 + $0x1c] sm:$0xf] %v546
      $region40: #{iautorec_forward.2} parent=31 // pred_fallthru
        _
      %s563 = smul.u32 8, %s19
      %p564 = scmp.lt.s32.totalorder %s563, 15
      %s565 = scalar_select %p564, %s563, 15
      %p566 = scmp.lt.s32.totalorder %s20, 0
      %s567 = scalar_select %p566, %s20, 0
      %s568 = sadd.s32 %s567, %s565
      %s569 = smul.addr %s568, 4
      %s570 = scalar_lea.vmem %s3, %s569
      // Predicated region
      $region41: #{iautorec_forward.2} parent=31 // pred_check
        %p571 = pneg %p135
      $region42: #{iautorec_forward.2} parent=31 // pred_check_branch
        %573 = sbr.rel (%p571) target = $region44
      $region43: #{iautorec_forward.2} parent=31 // pred_region
        %s574 = smul.u32 8, %s19
      $region44: #{iautorec_forward.2} parent=31 // pred_fallthru
        _
    $region32: #{iautorec_forward.2} parent=5 // pred_fallthru
      _
    %p575 = scmp.le.s32.totalorder 2, %s9
    // Predicated region
    $region45: #{iautorec_forward.2} parent=5 // pred_check
      %p576 = pneg %p575
    $region46: #{iautorec_forward.2} parent=5 // pred_check_branch
      %578 = sbr.rel (%p576) target = $region48
    $region47: #{iautorec_forward.2} parent=5 // pred_region
      %s579 = ssub.s32 %s9, 2
      // Predicated region
      $region49: #{iautorec_forward.2} parent=47 // pred_check
        %p580 = pneg %p141
      $region50: #{iautorec_forward.2} parent=47 // pred_check_branch
        %582 = sbr.rel (%p580) target = $region52
      $region51: #{iautorec_forward.2} parent=47 // pred_region
        %s583 = smul.u32 8, %s22
        %p584 = scmp.lt.s32.totalorder %s583, 15
        %s585 = scalar_select %p584, %s583, 15
        %p586 = scmp.lt.s32.totalorder %s23, 0
        %s587 = scalar_select %p586, %s23, 0
        %s588 = sadd.s32 %s587, %s585
        %s589 = smul.addr %s588, 4
        %s590 = scalar_lea.vmem %s3, %s589
      $region52: #{iautorec_forward.2} parent=47 // pred_fallthru
        _
    $region48: #{iautorec_forward.2} parent=5 // pred_fallthru
      _
  $region6: #{iautorec_forward.2} parent=0 // loop_footer
    %s13 = sadd.s32 1, %s9
  $region7: #{iautorec_forward.2} parent=0 // loop_footer_branch
    %8 = sbr.rel target = $region3
  $region8: #{iautorec_forward.2} parent=0 // loop_exit
    _

// kernel: iautorec_forward.3
$region0: #{iautorec_forward.3}
  #allocation0 [shape = 'u32[]', space=smem, size = 0x4, offset = 0x4, fixed_abs, tag = 'smem constant byte address 0x4 - core index']
  #allocation1 [shape = 'u32[144,128]{1,0:T(1,128)}', space=vmem, size = 0x12000, scoped, tag = 'internal scratch']
  %s0 = inlined_call_operand.vmem [shape: bf16[128,128], index: 0, kind: input, shape index: {}]
  %s1 = inlined_call_operand.vmem [shape: bf16[128,128], index: 1, kind: input, shape index: {}]
  %s2 = inlined_call_operand.vmem [shape: f32[1,128], index: 2, kind: input, shape index: {}]
  %s3 = inlined_call_operand.vmem [shape: f32[1,128], index: 3, kind: output, shape index: {}]
  %s4 = sld [smem:[#allocation0]]
  $region22: #{iautorec_forward.3} parent=0
    _
  %s6 = ssub.s32 1, %s4
  %s7 = scalar_select 0, %s6, %s4
  // Predicated region
  $region2: #{iautorec_forward.3} parent=0 // pred_check
    _
  $region3: #{iautorec_forward.3} parent=0 // pred_check_branch
    %9 = sbr.rel (0) target = $region5
  $region4: #{iautorec_forward.3} parent=0 // pred_region
    _
  $region5: #{iautorec_forward.3} parent=0 // pred_fallthru
    _
  // Predicated region
  $region6: #{iautorec_forward.3} parent=0 // pred_check
    _
  $region7: #{iautorec_forward.3} parent=0 // pred_check_branch
    %11 = sbr.rel (0) target = $region9
  $region8: #{iautorec_forward.3} parent=0 // pred_region
    _
  $region9: #{iautorec_forward.3} parent=0 // pred_fallthru
    _
  // Predicated region
  $region10: #{iautorec_forward.3} parent=0 // pred_check
    _
  $region11: #{iautorec_forward.3} parent=0 // pred_check_branch
    %13 = sbr.rel (0) target = $region13
  $region12: #{iautorec_forward.3} parent=0 // pred_region
    _
  $region13: #{iautorec_forward.3} parent=0 // pred_fallthru
    _
  %v14 = vld [vmem:[%s0] sm:$0xf]
  %v15 = vld [vmem:[%s0 + $0x4] sm:$0xf]
  %v16 = vld [vmem:[%s0 + $0x8] sm:$0xf]
  %v17 = vld [vmem:[%s0 + $0xc] sm:$0xf]
  %v18 = vld [vmem:[%s0 + $0x10] sm:$0xf]
  %v19 = vld [vmem:[%s0 + $0x14] sm:$0xf]
  %v20 = vld [vmem:[%s0 + $0x18] sm:$0xf]
  %v21 = vld [vmem:[%s0 + $0x1c] sm:$0xf]
  %v22 = vld [vmem:[%s0 + $0x20] sm:$0xf]
  %v23 = vld [vmem:[%s0 + $0x24] sm:$0xf]
  %v24 = vld [vmem:[%s0 + $0x28] sm:$0xf]
  %v25 = vld [vmem:[%s0 + $0x2c] sm:$0xf]
  %v26 = vld [vmem:[%s0 + $0x30] sm:$0xf]
  %v27 = vld [vmem:[%s0 + $0x34] sm:$0xf]
  %v28 = vld [vmem:[%s0 + $0x38] sm:$0xf]
  %v29 = vld [vmem:[%s0 + $0x3c] sm:$0xf]
  %v30 = vunpack.c.l.bf16 %v14
  %v31 = vunpack.c.l.bf16 %v15
  %v32 = vunpack.c.l.bf16 %v16
  %v33 = vunpack.c.l.bf16 %v17
  %v34 = vunpack.c.l.bf16 %v18
  %v35 = vunpack.c.l.bf16 %v19
  %v36 = vunpack.c.l.bf16 %v20
  %v37 = vunpack.c.l.bf16 %v21
  %v38 = vunpack.c.l.bf16 %v22
  %v39 = vunpack.c.l.bf16 %v23
  %v40 = vunpack.c.l.bf16 %v24
  %v41 = vunpack.c.l.bf16 %v25
  %v42 = vunpack.c.l.bf16 %v26
  %v43 = vunpack.c.l.bf16 %v27
  %v44 = vunpack.c.l.bf16 %v28
  %v45 = vunpack.c.l.bf16 %v29
  %v46 = vld [vmem:[%s1] sm:$0xf]
  %v47 = vld [vmem:[%s1 + $0x4] sm:$0xf]
  %v48 = vld [vmem:[%s1 + $0x8] sm:$0xf]
  %v49 = vld [vmem:[%s1 + $0xc] sm:$0xf]
  %v50 = vld [vmem:[%s1 + $0x10] sm:$0xf]
  %v51 = vld [vmem:[%s1 + $0x14] sm:$0xf]
  %v52 = vld [vmem:[%s1 + $0x18] sm:$0xf]
  %v53 = vld [vmem:[%s1 + $0x1c] sm:$0xf]
  %v54 = vld [vmem:[%s1 + $0x20] sm:$0xf]
  %v55 = vld [vmem:[%s1 + $0x24] sm:$0xf]
  %v56 = vld [vmem:[%s1 + $0x28] sm:$0xf]
  %v57 = vld [vmem:[%s1 + $0x2c] sm:$0xf]
  %v58 = vld [vmem:[%s1 + $0x30] sm:$0xf]
  %v59 = vld [vmem:[%s1 + $0x34] sm:$0xf]
  %v60 = vld [vmem:[%s1 + $0x38] sm:$0xf]
  %v61 = vld [vmem:[%s1 + $0x3c] sm:$0xf]
  %v62 = vunpack.c.l.bf16 %v46
  %v63 = vunpack.c.l.bf16 %v47
  %v64 = vunpack.c.l.bf16 %v48
  %v65 = vunpack.c.l.bf16 %v49
  %v66 = vunpack.c.l.bf16 %v50
  %v67 = vunpack.c.l.bf16 %v51
  %v68 = vunpack.c.l.bf16 %v52
  %v69 = vunpack.c.l.bf16 %v53
  %v70 = vunpack.c.l.bf16 %v54
  %v71 = vunpack.c.l.bf16 %v55
  %v72 = vunpack.c.l.bf16 %v56
  %v73 = vunpack.c.l.bf16 %v57
  %v74 = vunpack.c.l.bf16 %v58
  %v75 = vunpack.c.l.bf16 %v59
  %v76 = vunpack.c.l.bf16 %v60
  %v77 = vunpack.c.l.bf16 %v61
  %v78 = vmul.f32 %v30, %v62
  %v79 = vmul.f32 %v31, %v63
  %v80 = vmul.f32 %v32, %v64
  %v81 = vmul.f32 %v33, %v65
  %v82 = vmul.f32 %v34, %v66
  %v83 = vmul.f32 %v35, %v67
  %v84 = vmul.f32 %v36, %v68
  %v85 = vmul.f32 %v37, %v69
  %v86 = vmul.f32 %v38, %v70
  %v87 = vmul.f32 %v39, %v71
  %v88 = vmul.f32 %v40, %v72
  %v89 = vmul.f32 %v41, %v73
  %v90 = vmul.f32 %v42, %v74
  %v91 = vmul.f32 %v43, %v75
  %v92 = vmul.f32 %v44, %v76
  %v93 = vmul.f32 %v45, %v77
  %v94 = vadd.f32 %v78, %v79
  %v95 = vadd.f32 %v94, %v80
  %v96 = vadd.f32 %v95, %v81
  %v97 = vadd.f32 %v96, %v82
  %v98 = vadd.f32 %v97, %v83
  %v99 = vadd.f32 %v98, %v84
  %v100 = vadd.f32 %v99, %v85
  %v101 = vadd.f32 %v100, %v86
  %v102 = vadd.f32 %v101, %v87
  %v103 = vadd.f32 %v102, %v88
  %v104 = vadd.f32 %v103, %v89
  %v105 = vadd.f32 %v104, %v90
  %v106 = vadd.f32 %v105, %v91
  %v107 = vadd.f32 %v106, %v92
  %v108 = vadd.f32 %v107, %v93
  %v109 = vrot.slane %v108, 4
  %v110 = vadd.f32 %v108, %v109
  %v111 = vrot.slane %v110, 2
  %v112 = vadd.f32 %v110, %v111
  %v113 = vrot.slane %v112, 1
  %v114 = vadd.f32 %v112, %v113
  %v115 = vld [vmem:[%s2] sm:$0x1]
  %v116 = vadd.f32 %v114, %v115
  %117 = vst [vmem:[%s3] sm:$0x1] %v116
  // Predicated region
  $region14: #{iautorec_forward.3} parent=0 // pred_check
    _
  $region15: #{iautorec_forward.3} parent=0 // pred_check_branch
    %119 = sbr.rel (0) target = $region17
  $region16: #{iautorec_forward.3} parent=0 // pred_region
    _
  $region17: #{iautorec_forward.3} parent=0 // pred_fallthru
    _
  // Predicated region
  $region18: #{iautorec_forward.3} parent=0 // pred_check
    _
  $region19: #{iautorec_forward.3} parent=0 // pred_check_branch
    %121 = sbr.rel (0) target = $region21
  $region20: #{iautorec_forward.3} parent=0 // pred_region
    _
  $region21: #{iautorec_forward.3} parent=0 // pred_fallthru
    _

</llo_original>
